<compile_context>
chip_gen: v7x
topology: tpu7x:2x2x1
jax: 0.10.0
libtpu: 0.0.40
codegen_flags: <defaults>
</compile_context>

<pallas_src>
import functools

import jax
import jax.numpy as jnp
from jax.experimental import pallas as pl
from jax.experimental.pallas import tpu as pltpu


# --------------------------- VMEM configuration ---------------------------- #

def _vmem_config():
    """Generation-aware (scoped VMEM limit, per-buffer budget for the x tile)."""
    mib = 1024 * 1024
    try:
        phys = pltpu.get_tpu_info().vmem_capacity_bytes
    except Exception:  # query unavailable: assume the tightest case (v7x, 64 MiB)
        phys = 64 * mib
    if phys >= 128 * mib:            # v5e / v6e
        limit = 96 * mib
        budget = 16 * mib
    else:                            # v7x (64 MiB per TensorCore) or unknown
        limit = min(48 * mib, (phys * 3) // 4)
        budget = min(12 * mib, limit // 4)
    return limit, budget


_VMEM_LIMIT_BYTES, _X_BLOCK_BUDGET_BYTES = _vmem_config()


# ------------------------------ tiling utils ------------------------------- #

def _round_up(x: int, m: int) -> int:
    return ((x + m - 1) // m) * m


def _choose_tile(dim: int, align: int, cap: int) -> int:
    """Largest multiple of `align` that divides `dim`, capped at `cap`.

    Falls back to the full dimension when `dim` is not `align`-divisible — a
    full-extent block is always a legal Pallas block shape.
    """
    if dim % align != 0:
        return dim
    t = max(align, (min(cap, dim) // align) * align)
    while dim % t != 0:
        t -= align
    return t


def _split_for_two_cores(dim: int, tile: int, align: int) -> int:
    """If one block covers the whole axis, split it in two (alignment permitting)
    so both v7x TensorCores get a 'parallel' grid step; free since mem-bound."""
    if tile == dim and tile % (2 * align) == 0:
        return tile // 2
    return tile


# ----------------------------- kernels ------------------------------------ #

def _cls_pool_kernel(x_ref, o_ref):
    # x_ref: (tile_b, cls_last) window of the flattened (B, T*H) input; the
    # first H lanes of each row are token 0.
    o_ref[...] = x_ref[:, : o_ref.shape[-1]]


def _mean_pool_kernel(x_ref, mask_ref, o_ref):
    # x_ref: (tile_b, T, tile_h), mask_ref: (tile_b, T) -> o_ref: (tile_b, tile_h)
    m32 = mask_ref[...].astype(jnp.float32)                      # (tb, T)
    den = jnp.sum(m32, axis=1, keepdims=True)                    # (tb, 1)
    # All-padding rows give inf/nan, matching the PyTorch reference (no clamp).
    # reciprocal+multiply may differ from true division by ~1 ulp.
    inv = pl.reciprocal(den, approx=False)                       # EUP path

    if jnp.dtype(x_ref.dtype) == jnp.dtype(jnp.float32):
        # Exact f32 masked sum on the VPU (parity with the reference).
        num = jnp.sum(x_ref[...] * m32[:, :, None], axis=1)      # (tb, th)
    else:
        # bf16/f16: contract over T on the MXU with f32 accumulation; avoids
        # materializing an f32 copy of the whole tile in VMEM.
        num = jnp.einsum(
            "bt,bth->bh",
            mask_ref[...].astype(x_ref.dtype),
            x_ref[...],
            preferred_element_type=jnp.float32,
        )
    o_ref[...] = (num * inv).astype(o_ref.dtype)


# ----------------------------- wrappers ----------------------------------- #

@functools.partial(jax.jit, static_argnames=("encoder_pooler",))
def bos_token_direct(x, attn_mask, *, encoder_pooler="cls"):
    """Pallas implementation of BOSTokenDirect.forward.

    x:         [B, T, H]
    attn_mask: [B, T]
    returns:   [B, H]
    """
    B, T, H = x.shape
    isz = jnp.dtype(x.dtype).itemsize
    # Sublane packing: 8 rows for f32, 16 for bf16/f16 (dense vreg stores).
    sub = max(8, 32 // max(1, isz))

    if encoder_pooler == "cls":
        # (A plain XLA slice x[:, 0, :] is equally good; kept in Pallas as the
        # module translation.)  Flatten (T, H) so a (tile_b, cls_last) block
        # grabs a lane-aligned window containing token 0 of each row.
        tot = T * H
        x2 = x.reshape(B, tot)
        if H % 128 == 0:
            cls_last = H                          # exactly token 0
        else:
            cls_last = min(tot, _round_up(H, 128))  # ~128 lanes, not the whole row
        # Budget tile_b against the actual block width (no VMEM overflow even
        # for large-T, unaligned-H models; acute on v7x's 64 MiB VMEM).
        tb_cap = max(sub, _X_BLOCK_BUDGET_BYTES // max(1, cls_last * isz))
        tile_b = _choose_tile(B, sub, tb_cap)
        if B // tile_b == 1:
            tile_b = _split_for_two_cores(B, tile_b, sub)
        grid = (B // tile_b,)
        return pl.pallas_call(
            _cls_pool_kernel,
            out_shape=jax.ShapeDtypeStruct((B, H), x.dtype),
            grid=grid,
            in_specs=[pl.BlockSpec((tile_b, cls_last), lambda i: (i, 0))],
            out_specs=pl.BlockSpec((tile_b, H), lambda i: (i, 0)),
            compiler_params=pltpu.CompilerParams(
                dimension_semantics=("parallel",),
                vmem_limit_bytes=_VMEM_LIMIT_BYTES,
            ),
            cost_estimate=pl.CostEstimate(
                flops=0,
                transcendentals=0,
                bytes_accessed=B * cls_last * isz + B * H * isz,
            ),
        )(x2)

    elif encoder_pooler == "mean":
        slab = T * H * isz                        # bytes of one (1, T, H) row of x
        tb_min = sub if B % sub == 0 else B       # smallest legal batch tile (out block)
        if tb_min * slab <= _X_BLOCK_BUDGET_BYTES:
            # Preferred: full-H contiguous blocks; grow tile_b toward the budget.
            tile_h = H
            tile_b = _choose_tile(
                B, sub, max(tb_min, _X_BLOCK_BUDGET_BYTES // slab))
        else:
            # Very long T: even the minimum batch tile at full H busts the
            # budget -> keep tile_b minimal and split H on lane boundaries
            # (strided DMA, but only used when unavoidable).
            tile_b = tb_min
            tile_h = _choose_tile(
                H, 128,
                max(128, _X_BLOCK_BUDGET_BYTES // max(1, tile_b * T * isz)))
        if (B // tile_b) * (H // tile_h) == 1:
            # Keep >=2 'parallel' grid steps when possible (v7x has 2 TCs).
            tile_b = _split_for_two_cores(B, tile_b, sub)
        grid = (B // tile_b, H // tile_h)
        mask_isz = jnp.dtype(attn_mask.dtype).itemsize
        return pl.pallas_call(
            _mean_pool_kernel,
            out_shape=jax.ShapeDtypeStruct((B, H), x.dtype),
            grid=grid,
            in_specs=[
                pl.BlockSpec((tile_b, T, tile_h), lambda b, h: (b, 0, h)),
                pl.BlockSpec((tile_b, T), lambda b, h: (b, 0)),
            ],
            out_specs=pl.BlockSpec((tile_b, tile_h), lambda b, h: (b, h)),
            compiler_params=pltpu.CompilerParams(
                dimension_semantics=("parallel", "parallel"),
                vmem_limit_bytes=_VMEM_LIMIT_BYTES,
            ),
            cost_estimate=pl.CostEstimate(
                flops=2 * B * T * H,
                transcendentals=0,
                bytes_accessed=B * T * H * isz + B * T * mask_isz + B * H * isz,
            ),
        )(x, attn_mask)

    else:
        raise ValueError(f"unknown encoder_pooler: {encoder_pooler}")


# ----------------------------- reference ---------------------------------- #

def bos_token_direct_ref(x, attn_mask, encoder_pooler="cls"):
    if encoder_pooler == "cls":
        return x[:, 0, :]
    elif encoder_pooler == "mean":
        m = attn_mask.astype(jnp.float32)
        return (x.astype(jnp.float32) * m[:, :, None]).sum(1) / m.sum(1)[:, None]


# ------------------------------- main -------------------------------------- #

if __name__ == "__main__":
    key = jax.random.PRNGKey(0)
    kx, ky, kz = jax.random.split(key, 3)

    ok = True

    # 1) Small f32 shapes (module-implied sizes): B=2, T=8, H=32 — exercises the
    #    unaligned-H CLS fallback (128-lane window) and the full-H mean path.
    B, T, H = 2, 8, 32
    x = jax.random.normal(kx, (B, T, H), dtype=jnp.float32)
    attn_mask = jnp.ones((B, T), dtype=jnp.float32).at[1, -2:].set(0.0)
    for mode in ("cls", "mean"):
        out = jax.block_until_ready(bos_token_direct(x, attn_mask, encoder_pooler=mode))
        ref = bos_token_direct_ref(x, attn_mask, encoder_pooler=mode)
        if out.shape != (B, H) or not jnp.allclose(out, ref, atol=1e-4, rtol=1e-4):
            ok = False

    # 2) Lane-aligned bf16 shapes: token-0-only CLS BlockSpec and the MXU
    #    (einsum, f32 accumulation) mean path, 16-row sublane packing.
    B2, T2, H2 = 8, 16, 256
    x2 = jax.random.normal(ky, (B2, T2, H2), dtype=jnp.bfloat16)
    m2 = jnp.ones((B2, T2), dtype=jnp.float32).at[:, -3:].set(0.0)
    for mode in ("cls", "mean"):
        out = jax.block_until_ready(bos_token_direct(x2, m2, encoder_pooler=mode))
        ref = bos_token_direct_ref(x2.astype(jnp.float32), m2, encoder_pooler=mode)
        if out.shape != (B2, H2) or not jnp.allclose(
            out.astype(jnp.float32), ref, atol=3e-2, rtol=3e-2
        ):
            ok = False

    # 3) f32 with B divisible by 16: exercises the two-core grid split
    #    (tile_b = B -> B/2, grid >= 2) in both paths.
    B3, T3, H3 = 16, 32, 128
    x3 = jax.random.normal(kz, (B3, T3, H3), dtype=jnp.float32)
    m3 = jnp.ones((B3, T3), dtype=jnp.float32).at[:, -5:].set(0.0)
    for mode in ("cls", "mean"):
        out = jax.block_until_ready(bos_token_direct(x3, m3, encoder_pooler=mode))
        ref = bos_token_direct_ref(x3, m3, encoder_pooler=mode)
        if out.shape != (B3, H3) or not jnp.allclose(out, ref, atol=1e-4, rtol=1e-4):
            ok = False

    if ok:
        print("KERNEL_OK")
    else:
        print("KERNEL_MISMATCH")
</pallas_src>

<mosaic_0001>
module attributes {stable_mosaic.version = 11 : i64} {
  func.func @_cls_pool_kernel(%arg0: i32, %arg1: memref<2x128xf32, #tpu.memory_space<vmem>>, %arg2: memref<2x32xf32, #tpu.memory_space<vmem>>) attributes {dimension_semantics = [#tpu.dimension_semantics<parallel>], iteration_bounds = array<i64: 1>, scalar_prefetch = 0 : i64, scratch_operands = 0 : i64, tpu.core_type = #tpu.core_type<tc>, window_params = [{transform_indices = @transform_0, window_bounds = array<i64: 2, 128>}, {transform_indices = @transform_1, window_bounds = array<i64: 2, 32>}]} {
    %c0 = arith.constant 0 : index
    %c0_0 = arith.constant 0 : index
    %0 = vector.load %arg1[%c0, %c0_0] : memref<2x128xf32, #tpu.memory_space<vmem>>, vector<2x32xf32>
    %c0_1 = arith.constant 0 : index
    %c0_2 = arith.constant 0 : index
    %1 = vector.load %arg2[%c0_1, %c0_2] : memref<2x32xf32, #tpu.memory_space<vmem>>, vector<2x32xf32>
    tpu.vector_store %arg2[%c0_1, %c0_2], %0 {strides = array<i32>} : memref<2x32xf32, #tpu.memory_space<vmem>>, vector<2x32xf32>,
    return
  }
  func.func @transform_0(%arg0: i32) -> (i32, i32) {
    %c0_i32 = arith.constant 0 : i32
    %c0_i32_0 = arith.constant 0 : i32
    return %arg0, %c0_i32 : i32, i32
  }
  func.func @transform_1(%arg0: i32) -> (i32, i32) {
    %c0_i32 = arith.constant 0 : i32
    %c0_i32_0 = arith.constant 0 : i32
    return %arg0, %c0_i32 : i32, i32
  }
}

</mosaic_0001>

<llo_original>
// kernel: bos_token_direct.1
$region0: #{bos_token_direct.1}
  #allocation0 [shape = 'u32[]', space=smem, size = 0x4, offset = 0x4, fixed_abs, tag = 'smem constant byte address 0x4 - core index']
  #allocation1 [shape = 'u32[144,128]{1,0:T(1,128)}', space=vmem, size = 0x12000, scoped, tag = 'internal scratch']
  %s0 = inlined_call_operand.vmem [shape: f32[2,256], index: 0, kind: input, shape index: {}]
  %s1 = inlined_call_operand.hbm [shape: f32[2,32], index: 1, kind: output, shape index: {}]
  %s2 = sld [smem:[#allocation0]]
  $region14: #{bos_token_direct.1} parent=0
    _
  %s4 = ssub.s32 1, %s2
  %s5 = scalar_select 0, %s4, %s2
  $region1: #{bos_token_direct.1} parent=0
    #allocation2 [shape = 'u8[1024]{0}', space=vmem, size = 0x400, scoped, tag = 'output window, operand 0, single buffered']
    #allocation3 [shape = 's32[1]{0}', space=sflag, size = 0x4, scoped, tag = 'scoped memory for bos_token_direct.1']
    %6 = vsyncpa [#allocation3], 0
    // Predicated region
    $region2: #{bos_token_direct.1} parent=1 // pred_check
      _
    $region3: #{bos_token_direct.1} parent=1 // pred_check_branch
      %8 = sbr.rel (0) target = $region5
    $region4: #{bos_token_direct.1} parent=1 // pred_region
      _
    $region5: #{bos_token_direct.1} parent=1 // pred_fallthru
      _
    %v9 = vld [vmem:[%s0] sm:$0x3]
    %vm10 = vcmask 254976
    %11 = vst.msk [vmem:[#allocation2] sm:$0x3] %vm10, %v9
    // Predicated region
    $region6: #{bos_token_direct.1} parent=1 // pred_check
      _
    $region7: #{bos_token_direct.1} parent=1 // pred_check_branch
      %13 = sbr.rel (0) target = $region9
    $region8: #{bos_token_direct.1} parent=1 // pred_region
      %s15 = ssub.s32 32, 32
      %16 = vsyncadd [#allocation3], %s15
      %s18 = sshll.u32 [#allocation2], 4
      %s19 = int_to_ptr.vmem [resolvable:$true] %s18
      %21 = dma.vmem_to_hbm [thread:$0]  %s19, 32, %s1, [#allocation3]
    $region9: #{bos_token_direct.1} parent=1 // pred_fallthru
      _
    // Predicated region
    $region10: #{bos_token_direct.1} parent=1 // pred_check
      _
    $region11: #{bos_token_direct.1} parent=1 // pred_check_branch
      %23 = sbr.rel (0) target = $region13
    $region12: #{bos_token_direct.1} parent=1 // pred_region
      %24 = dma.done [#allocation3], 32
    $region13: #{bos_token_direct.1} parent=1 // pred_fallthru
      _
    %25 = vsyncpa [#allocation3], 1

</llo_original>
